<compile_context>
chip_gen: v6e
topology: v6e:2x2x1
jax: 0.10.0
libtpu: 0.0.40
codegen_flags: <defaults>
</compile_context>

<pallas_src>
import functools

import jax
import jax.numpy as jnp
from jax.experimental import pallas as pl
from jax.experimental.pallas import tpu as pltpu


# --------------------------------------------------------------------------- #
# Kernel
# --------------------------------------------------------------------------- #
def _copy_generator_kernel(tile_t, batch, vocab, vpad,
                           hidden_ref, wext_ref, bext_ref, attn_ref, src_ref,
                           out_ref):
    # hidden_ref : (tile_N, D)          bf16, tile_N = tile_t * batch
    # wext_ref   : (D, Vp + 128)        bf16; cols [0,V)=W, col Vp = Wc
    # bext_ref   : (1, Vp + 128)        f32; pad & padded-vocab cols = -1e30
    # attn_ref   : (tile_N, S)          bf16 (raw attention, un-gated)
    # src_ref    : (B, S, C)            bf16, resident across the whole grid
    # out_ref    : (tile_N, V + C)      f32 fused output block
    h = hidden_ref[...]

    # One MXU matmul produces both the (padded) vocab logits and the gate.
    z = jnp.dot(h, wext_ref[...], preferred_element_type=jnp.float32)
    z = z + bext_ref[...]
    logits = z[:, :vpad]                              # tile-aligned view
    p_copy = jax.nn.sigmoid(z[:, vpad:vpad + 1])      # (tile_N, 1) f32

    # Softmax over the (padded) target vocab; padded/pad columns have logits
    # -1e30 so exp underflows to exactly 0 and the sum equals the true sum.
    m = jnp.max(logits, axis=1, keepdims=True)
    e = jnp.exp(logits - m)
    l = jnp.sum(e, axis=1, keepdims=True)
    # Fused normalization + gate scale (single wide multiply, exact divide on
    # the narrow (tile_N, 1) vector -> no approx-reciprocal error).
    scale = (1.0 - p_copy) / l
    out_ref[:, :vocab] = e[:, :vocab] * scale

    # Copy distribution: batched contraction over source length, with the
    # resident src_map already (B, S, C) so only the small attn tile needs a
    # per-step relayout.  Gate applied after the contraction (keeps bf16 MXU
    # operands and one fewer wide multiply before the dot).
    slen = attn_ref.shape[1]
    attn3 = attn_ref[...].reshape(tile_t, batch, slen)          # (Tt, B, S)
    copy = jnp.einsum("tbs,bsc->tbc", attn3, src_ref[...],
                      preferred_element_type=jnp.float32)       # (Tt, B, C)
    out_ref[:, vocab:] = copy.reshape(tile_t * batch, -1) * p_copy


# --------------------------------------------------------------------------- #
# Tiling / VMEM planning
# --------------------------------------------------------------------------- #
def _round_up(x, m):
    return ((x + m - 1) // m) * m


def _vmem_capacity_bytes():
    """Generation-aware VMEM capacity (v5e/v6e: 128 MiB, v7x: 64 MiB)."""
    try:
        info = pltpu.get_tpu_info()
        for attr in ("vmem_capacity_bytes", "vmem_bytes", "vmem_size_bytes"):
            v = getattr(info, attr, None)
            if v:
                return int(v)
    except Exception:
        pass
    return 128 * 1024 * 1024


def _choose_tile_t(T, B, max_rows):
    """Pick the decode-step tile: rows = tile_t*B must be a multiple of 8
    sublanes (or cover the full array); prefer tiles that divide T exactly and
    whose row count is a multiple of 256 / 128 (MXU M dimension)."""
    cap = max(1, min(T, max_rows // max(B, 1)))
    candidates = [tt for tt in range(1, cap + 1)
                  if (tt * B) % 8 == 0 or tt == T]
    if not candidates:
        return T  # full block; block dim == full array dim is always legal

    def key(tt):
        rows = tt * B
        return (T % tt == 0, rows % 256 == 0, rows % 128 == 0, tt)

    return max(candidates, key=key)


def _plan_tiling(T, B, D, S, V, C, Vp, gate=128):
    """Size the row tile and the scoped-VMEM limit from the actual working set
    and the device's VMEM capacity (so v7x does not overshoot 64 MiB while
    v5e/v6e use their 128 MiB for 512-1024-row tiles)."""
    cap = _vmem_capacity_bytes()
    budget = int(cap * 0.7)                       # headroom for compiler scratch
    width = Vp + gate
    # Single-buffered residents.
    resident = D * width * 2 + width * 4 + B * S * C * 2
    # Per-output-row bytes: double-buffered hidden/attn/out + f32 intermediates.
    per_row = 2 * (D * 2) + 2 * (S * 2) + 2 * ((V + C) * 4) + 3 * (width * 4)
    avail = max(budget - resident, 0)
    max_rows = max(B, min(1024, avail // max(per_row, 1)))
    tile_t = _choose_tile_t(T, B, max_rows)
    need = resident + (tile_t * B) * per_row + (4 << 20)
    vmem_limit = int(min(cap * 0.9, max(2 * need, 64 << 20)))
    return tile_t, vmem_limit


# --------------------------------------------------------------------------- #
# One-time parameter prep + jitted forward
# --------------------------------------------------------------------------- #
def make_copy_generator(W, b, Wc, bc, pad_idx):
    """One-time prep (gate fusion, vocab padding, pad masking, bf16 cast) and a
    jitted forward(hidden, attn, src_map) closure over the fused parameters."""
    f32, bf16 = jnp.float32, jnp.bfloat16
    W = jnp.asarray(W, f32)
    D, V = W.shape
    Vp = _round_up(V, 128)       # lane-aligned vocab width
    G = 128                      # dedicated lane group for the copy gate

    w_ext = jnp.zeros((D, Vp + G), dtype=f32)
    w_ext = w_ext.at[:, :V].set(W)
    w_ext = w_ext.at[:, Vp].set(jnp.asarray(Wc, f32).reshape(-1))
    w_ext = w_ext.astype(bf16)

    b_ext = jnp.full((Vp + G,), -1e30, dtype=f32)      # padded vocab cols -> 0 prob
    b_ext = b_ext.at[:V].set(jnp.asarray(b, f32))
    b_ext = b_ext.at[pad_idx].set(-1e30)               # pad column masked
    b_ext = b_ext.at[Vp].set(jnp.asarray(bc, f32).reshape(()))
    b_ext = b_ext.at[Vp + 1:].set(0.0)                 # unused gate lanes
    b_ext = b_ext.reshape(1, Vp + G)

    def forward(hidden, attn, src_map):
        N, D_ = hidden.shape
        N2, S = attn.shape
        S2, B, C = src_map.shape
        assert D_ == D and N == N2 and S == S2 and N % B == 0, "bad shapes"
        T = N // B

        tile_t, vmem_limit = _plan_tiling(T, B, D, S, V, C, Vp, G)
        tile_n = tile_t * B

        h = hidden.astype(bf16)
        a = attn.astype(bf16)
        s = jnp.transpose(src_map, (1, 0, 2)).astype(bf16)   # (B, S, C)

        kernel = functools.partial(_copy_generator_kernel, tile_t, B, V, Vp)

        return pl.pallas_call(
            kernel,
            grid=(pl.cdiv(T, tile_t),),
            in_specs=[
                pl.BlockSpec((tile_n, D), lambda i: (i, 0)),          # hidden
                pl.BlockSpec((D, Vp + G), lambda i: (0, 0),
                             pipeline_mode=pl.Buffered(1)),           # W_ext
                pl.BlockSpec((1, Vp + G), lambda i: (0, 0),
                             pipeline_mode=pl.Buffered(1)),           # b_ext
                pl.BlockSpec((tile_n, S), lambda i: (i, 0)),          # attn
                pl.BlockSpec((B, S, C), lambda i: (0, 0, 0),
                             pipeline_mode=pl.Buffered(1)),           # src_map
            ],
            out_specs=pl.BlockSpec((tile_n, V + C), lambda i: (i, 0)),
            out_shape=jax.ShapeDtypeStruct((N, V + C), jnp.float32),
            compiler_params=pltpu.CompilerParams(
                dimension_semantics=("parallel",),
                vmem_limit_bytes=vmem_limit,
            ),
        )(h, w_ext, b_ext, a, s)

    return jax.jit(forward)


# --------------------------------------------------------------------------- #
# Pure-JAX reference (mirrors the PyTorch forward) and a small test
# --------------------------------------------------------------------------- #
def _reference_forward(hidden, attn, src_map, W, b, Wc, bc, pad_idx):
    hp = jax.lax.Precision.HIGHEST
    hidden = hidden.astype(jnp.float32)
    attn = attn.astype(jnp.float32)
    src_map = src_map.astype(jnp.float32)
    N, D = hidden.shape
    S, B, C = src_map.shape
    T = N // B
    logits = jnp.dot(hidden, W, precision=hp) + b
    logits = logits.at[:, pad_idx].set(-jnp.inf)
    prob = jax.nn.softmax(logits, axis=1)
    p_copy = jax.nn.sigmoid(jnp.dot(hidden, Wc.reshape(D, 1), precision=hp) + bc)
    out_prob = prob * (1.0 - p_copy)
    mul_attn = attn * p_copy
    copy = jnp.einsum("bts,bsc->btc",
                      mul_attn.reshape(T, B, S).transpose(1, 0, 2),
                      src_map.transpose(1, 0, 2), precision=hp)
    copy = copy.transpose(1, 0, 2).reshape(N, C)
    return jnp.concatenate([out_prob, copy], axis=1)


if __name__ == "__main__":
    # Small shapes consistent with the module's forward contract.
    batch, tlen = 2, 4
    N = batch * tlen          # batch_by_tlen
    input_size = 32           # D
    output_size = 32          # V (target vocab)
    slen = 8                  # S
    cvocab = 8                # extended-vocab extra words (C)
    pad_idx = 0

    key = jax.random.PRNGKey(0)
    k_h, k_a, k_s, k_w, k_wc = jax.random.split(key, 5)
    f32, bf16 = jnp.float32, jnp.bfloat16

    # Activations in bf16 (what a real decoder feeds the generator).
    hidden = jax.random.normal(k_h, (N, input_size), dtype=f32).astype(bf16)
    attn = jax.nn.softmax(
        jax.random.normal(k_a, (N, slen), dtype=f32), axis=-1).astype(bf16)
    src_idx = jax.random.randint(k_s, (slen, batch), 0, cvocab)
    src_map = jax.nn.one_hot(src_idx, cvocab, dtype=bf16)   # (S, B, C), exact 0/1

    # Weights rounded to bf16-representable values so the bf16-MXU kernel and
    # the f32 reference see identical parameters.
    lim_w = (6.0 / (input_size + output_size)) ** 0.5
    W = jax.random.uniform(k_w, (input_size, output_size),
                           minval=-lim_w, maxval=lim_w,
                           dtype=f32).astype(bf16).astype(f32)
    b = jnp.zeros((output_size,), dtype=f32)
    lim_wc = (6.0 / (input_size + 1)) ** 0.5
    Wc = jax.random.uniform(k_wc, (1, input_size),
                            minval=-lim_wc, maxval=lim_wc,
                            dtype=f32).astype(bf16).astype(f32)
    bc = jnp.zeros((1,), dtype=f32)

    forward = make_copy_generator(W, b, Wc, bc, pad_idx)   # one-time param prep
    out = jax.block_until_ready(forward(hidden, attn, src_map))

    ref = _reference_forward(hidden, attn, src_map, W, b, Wc, bc, pad_idx)
    assert out.shape == (N, output_size + cvocab)
    max_err = float(jnp.max(jnp.abs(out - ref)))
    assert jnp.allclose(out, ref, atol=1e-4, rtol=1e-3), f"mismatch: {max_err}"

    print("KERNEL_OK")
</pallas_src>

<mosaic_0001>
module attributes {stable_mosaic.version = 11 : i64} {
  func.func @_copy_generator_kernel(%arg0: i32, %arg1: memref<8x32xbf16, #tpu.memory_space<vmem>>, %arg2: memref<32x256xbf16, #tpu.memory_space<vmem>>, %arg3: memref<1x256xf32, #tpu.memory_space<vmem>>, %arg4: memref<8x8xbf16, #tpu.memory_space<vmem>>, %arg5: memref<2x8x8xbf16, #tpu.memory_space<vmem>>, %arg6: memref<8x40xf32, #tpu.memory_space<vmem>>) attributes {dimension_semantics = [#tpu.dimension_semantics<parallel>], iteration_bounds = array<i64: 1>, scalar_prefetch = 0 : i64, scratch_operands = 0 : i64, tpu.core_type = #tpu.core_type<tc>, window_params = [{transform_indices = @transform_0, window_bounds = array<i64: 8, 32>}, {pipeline_mode = #tpu.pipeline_mode<synchronous>, transform_indices = @transform_1, window_bounds = array<i64: 32, 256>}, {pipeline_mode = #tpu.pipeline_mode<synchronous>, transform_indices = @transform_2, window_bounds = array<i64: 1, 256>}, {transform_indices = @transform_3, window_bounds = array<i64: 8, 8>}, {pipeline_mode = #tpu.pipeline_mode<synchronous>, transform_indices = @transform_4, window_bounds = array<i64: 2, 8, 8>}, {transform_indices = @transform_5, window_bounds = array<i64: 8, 40>}]} {
    %c0 = arith.constant 0 : index
    %c0_0 = arith.constant 0 : index
    %0 = vector.load %arg1[%c0, %c0_0] : memref<8x32xbf16, #tpu.memory_space<vmem>>, vector<8x32xbf16>
    %c0_1 = arith.constant 0 : index
    %c0_2 = arith.constant 0 : index
    %1 = vector.load %arg2[%c0_1, %c0_2] : memref<32x256xbf16, #tpu.memory_space<vmem>>, vector<32x256xbf16>
    %cst = arith.constant dense<0.000000e+00> : vector<8x256xf32>
    %2 = tpu.matmul %0, %1, %cst {dimension_numbers = #tpu.dot_dimension_numbers<[1], [0], [0], [1], [0, 0, 1, 1], [], []>} : vector<8x32xbf16>, vector<32x256xbf16>, vector<8x256xf32> -> vector<8x256xf32>
    %c0_3 = arith.constant 0 : index
    %c0_4 = arith.constant 0 : index
    %3 = vector.load %arg3[%c0_3, %c0_4] : memref<1x256xf32, #tpu.memory_space<vmem>>, vector<1x256xf32>
    %4 = vector.broadcast %3 : vector<1x256xf32> to vector<8x256xf32>
    %5 = arith.addf %2, %4 : vector<8x256xf32>
    %6 = vector.extract_strided_slice %5 {offsets = [0, 0], sizes = [8, 128], strides = [1, 1]} : vector<8x256xf32> to vector<8x128xf32>
    %7 = vector.extract_strided_slice %5 {offsets = [0, 128], sizes = [8, 1], strides = [1, 1]} : vector<8x256xf32> to vector<8x1xf32>
    %8 = arith.negf %7 : vector<8x1xf32>
    %9 = math.exp %8 : vector<8x1xf32>
    %cst_5 = arith.constant 1.000000e+00 : f32
    %10 = vector.broadcast %cst_5 : f32 to vector<8x1xf32>
    %11 = arith.addf %10, %9 : vector<8x1xf32>
    %12 = arith.divf %10, %11 : vector<8x1xf32>
    %cst_6 = arith.constant dense<0xFF800000> : vector<8xf32>
    %13 = vector.multi_reduction <maximumf>, %6, %cst_6 [1] : vector<8x128xf32> to vector<8xf32>
    %14 = vector.shape_cast %13 : vector<8xf32> to vector<8x1xf32>
    %15 = vector.broadcast %14 : vector<8x1xf32> to vector<8x128xf32>
    %16 = arith.subf %6, %15 : vector<8x128xf32>
    %17 = math.exp %16 : vector<8x128xf32>
    %cst_7 = arith.constant dense<0.000000e+00> : vector<8xf32>
    %18 = vector.multi_reduction <add>, %17, %cst_7 [1] : vector<8x128xf32> to vector<8xf32>
    %19 = vector.shape_cast %18 : vector<8xf32> to vector<8x1xf32>
    %cst_8 = arith.constant 1.000000e+00 : f32
    %20 = vector.broadcast %cst_8 : f32 to vector<8x1xf32>
    %21 = arith.subf %20, %12 : vector<8x1xf32>
    %22 = arith.divf %21, %19 : vector<8x1xf32>
    %23 = vector.extract_strided_slice %17 {offsets = [0, 0], sizes = [8, 32], strides = [1, 1]} : vector<8x128xf32> to vector<8x32xf32>
    %24 = vector.broadcast %22 : vector<8x1xf32> to vector<8x32xf32>
    %25 = arith.mulf %23, %24 : vector<8x32xf32>
    %c0_9 = arith.constant 0 : index
    %c0_10 = arith.constant 0 : index
    %26 = vector.load %arg6[%c0_9, %c0_10] : memref<8x40xf32, #tpu.memory_space<vmem>>, vector<8x32xf32>
    tpu.vector_store %arg6[%c0_9, %c0_10], %25 {strides = array<i32>} : memref<8x40xf32, #tpu.memory_space<vmem>>, vector<8x32xf32>,
    %c0_11 = arith.constant 0 : index
    %c0_12 = arith.constant 0 : index
    %27 = vector.load %arg4[%c0_11, %c0_12] : memref<8x8xbf16, #tpu.memory_space<vmem>>, vector<8x8xbf16>
    %28 = vector.shape_cast %27 : vector<8x8xbf16> to vector<4x2x8xbf16>
    %c0_13 = arith.constant 0 : index
    %c0_14 = arith.constant 0 : index
    %c0_15 = arith.constant 0 : index
    %29 = vector.load %arg5[%c0_13, %c0_14, %c0_15] : memref<2x8x8xbf16, #tpu.memory_space<vmem>>, vector<2x8x8xbf16>
    "tpu.trace_start"() <{level = 10 : i32, message = "tbs,bsc->tbc"}> : () -> ()
    %cst_16 = arith.constant dense<0.000000e+00> : vector<2x8x4xf32>
    %30 = tpu.matmul %29, %28, %cst_16 {dimension_numbers = #tpu.dot_dimension_numbers<[1], [2], [2], [0], [0, 0, 0, 2, 1, 0], [0], [1]>} : vector<2x8x8xbf16>, vector<4x2x8xbf16>, vector<2x8x4xf32> -> vector<2x8x4xf32>
    %31 = tpu.transpose %30, [2, 0, 1] : vector<2x8x4xf32> -> vector<4x2x8xf32>
    "tpu.trace_stop"() : () -> ()
    %32 = vector.shape_cast %31 : vector<4x2x8xf32> to vector<8x8xf32>
    %33 = vector.broadcast %12 : vector<8x1xf32> to vector<8x8xf32>
    %34 = arith.mulf %32, %33 : vector<8x8xf32>
    %c0_17 = arith.constant 0 : index
    %c32 = arith.constant 32 : index
    %35 = vector.load %arg6[%c0_17, %c32] : memref<8x40xf32, #tpu.memory_space<vmem>>, vector<8x8xf32>
    tpu.vector_store %arg6[%c0_17, %c32], %34 {strides = array<i32>} : memref<8x40xf32, #tpu.memory_space<vmem>>, vector<8x8xf32>,
    return
  }
  func.func @transform_0(%arg0: i32) -> (i32, i32) {
    %c0_i32 = arith.constant 0 : i32
    %c0_i32_0 = arith.constant 0 : i32
    return %arg0, %c0_i32 : i32, i32
  }
  func.func @transform_1(%arg0: i32) -> (i32, i32) {
    %c0_i32 = arith.constant 0 : i32
    %c0_i32_0 = arith.constant 0 : i32
    %c0_i32_1 = arith.constant 0 : i32
    return %c0_i32, %c0_i32_0 : i32, i32
  }
  func.func @transform_2(%arg0: i32) -> (i32, i32) {
    %c0_i32 = arith.constant 0 : i32
    %c0_i32_0 = arith.constant 0 : i32
    %c0_i32_1 = arith.constant 0 : i32
    return %c0_i32, %c0_i32_0 : i32, i32
  }
  func.func @transform_3(%arg0: i32) -> (i32, i32) {
    %c0_i32 = arith.constant 0 : i32
    %c0_i32_0 = arith.constant 0 : i32
    return %arg0, %c0_i32 : i32, i32
  }
  func.func @transform_4(%arg0: i32) -> (i32, i32, i32) {
    %c0_i32 = arith.constant 0 : i32
    %c0_i32_0 = arith.constant 0 : i32
    %c0_i32_1 = arith.constant 0 : i32
    %c0_i32_2 = arith.constant 0 : i32
    return %c0_i32, %c0_i32_0, %c0_i32_1 : i32, i32, i32
  }
  func.func @transform_5(%arg0: i32) -> (i32, i32) {
    %c0_i32 = arith.constant 0 : i32
    %c0_i32_0 = arith.constant 0 : i32
    return %arg0, %c0_i32 : i32, i32
  }
}

</mosaic_0001>

<llo_original>
// kernel: forward.1
$region0: #{forward.1}
  #allocation0 [shape = 'u32[]', space=smem, size = 0x4, offset = 0x4, fixed_abs, tag = 'smem constant byte address 0x4 - core index']
  #allocation1 [shape = 'u32[144,128]{1,0:T(1,128)}', space=vmem, size = 0x12000, scoped, tag = 'internal scratch']
  %s0 = inlined_call_operand.vmem [shape: bf16[8,32], index: 0, kind: input, shape index: {}]
  %s1 = inlined_call_operand.hbm [shape: bf16[32,256], index: 1, kind: input, shape index: {}]
  %s2 = inlined_call_operand.vmem [shape: f32[1,256], index: 2, kind: input, shape index: {}]
  %s3 = inlined_call_operand.vmem [shape: bf16[8,8], index: 3, kind: input, shape index: {}]
  %s4 = inlined_call_operand.vmem [shape: bf16[2,8,8], index: 4, kind: input, shape index: {}]
  %s5 = inlined_call_operand.hbm [shape: f32[8,40], index: 5, kind: output, shape index: {}]
  %s6 = sld [smem:[#allocation0]]
  $region34: #{forward.1} parent=0
    _
  %s8 = ssub.s32 1, %s6
  %s9 = scalar_select 0, %s8, %s6
  $region1: #{forward.1} parent=0
    #allocation2 [shape = 'u8[16384]{0}', space=vmem, size = 0x4000, scoped, tag = 'input window, operand 1, single buffered']
    #allocation3 [shape = 's32[1]{0}', space=sflag, size = 0x4, scoped, tag = 'scoped memory for forward.1']
    #allocation4 [shape = 's32[1]{0}', space=sflag, size = 0x4, scoped, tag = 'scoped memory for forward.1']
    #allocation5 [shape = 'u8[4096]{0}', space=vmem, size = 0x1000, scoped, tag = 'output window, operand 0, single buffered']
    %10 = vsyncpa [#allocation3], 0
    %11 = vsyncpa [#allocation4], 0
    // Predicated region
    $region2: #{forward.1} parent=1 // pred_check
      _
    $region3: #{forward.1} parent=1 // pred_check_branch
      %13 = sbr.rel (0) target = $region5
    $region4: #{forward.1} parent=1 // pred_region
      _
    $region5: #{forward.1} parent=1 // pred_fallthru
      _
    // Predicated region
    $region6: #{forward.1} parent=1 // pred_check
      _
    $region7: #{forward.1} parent=1 // pred_check_branch
      %15 = sbr.rel (0) target = $region9
    $region8: #{forward.1} parent=1 // pred_region
      %s17 = ssub.s32 512, 512
      %18 = vsyncadd [#allocation3], %s17
      %s19 = sshll.u32 [#allocation2], 4
      %s20 = int_to_ptr.vmem [resolvable:$true] %s19
      %25 = dma.hbm_to_vmem [thread:$0]  %s1, 512, %s20, [#allocation3], 128, 128, 8
    $region9: #{forward.1} parent=1 // pred_fallthru
      _
    // Predicated region
    $region10: #{forward.1} parent=1 // pred_check
      _
    $region11: #{forward.1} parent=1 // pred_check_branch
      %27 = sbr.rel (0) target = $region13
    $region12: #{forward.1} parent=1 // pred_region
      _
    $region13: #{forward.1} parent=1 // pred_fallthru
      _
    // Predicated region
    $region14: #{forward.1} parent=1 // pred_check
      _
    $region15: #{forward.1} parent=1 // pred_check_branch
      %29 = sbr.rel (0) target = $region17
    $region16: #{forward.1} parent=1 // pred_region
      _
    $region17: #{forward.1} parent=1 // pred_fallthru
      _
    // Predicated region
    $region18: #{forward.1} parent=1 // pred_check
      _
    $region19: #{forward.1} parent=1 // pred_check_branch
      %31 = sbr.rel (0) target = $region21
    $region20: #{forward.1} parent=1 // pred_region
      _
    $region21: #{forward.1} parent=1 // pred_fallthru
      _
    // Predicated region
    $region22: #{forward.1} parent=1 // pred_check
      _
    $region23: #{forward.1} parent=1 // pred_check_branch
      %33 = sbr.rel (0) target = $region25
    $region24: #{forward.1} parent=1 // pred_region
      %34 = dma.done [#allocation3], 512
    $region25: #{forward.1} parent=1 // pred_fallthru
      _
    %v36 = vld [vmem:[%s0] sm:$0xf]
    %v37 = vld [vmem:[#allocation2] sm:$0xff]
    %v38 = vld [vmem:[#allocation2 + $0x8] sm:$0xff]
    %v39 = vld [vmem:[#allocation2 + $0x10] sm:$0xff]
    %v40 = vld [vmem:[#allocation2 + $0x18] sm:$0xff]
    %v41 = vld [vmem:[%s2] sm:$0x3]
    %v43 = vlaneseq
    %v44 = vshrl.u32 %v43, 7
    %v45 = vsub.s32 0, %v44
    %v46 = vrot.slane %v41, %v45
    %v47 = vlaneseq
    %v48 = vshrl.u32 %v47, 7
    %v49 = vsub.s32 1, %v48
    %v50 = vrot.slane %v41, %v49
    %v57 = vunpack.c.l.b16 %v37
    %v58 = vunpack.c.h.b16 %v37
    %v59 = vunpack.c.l.b16 %v38
    %v60 = vunpack.c.h.b16 %v38
    %v61 = vunpack.c.l.b16 %v39
    %v62 = vunpack.c.h.b16 %v39
    %v63 = vunpack.c.l.b16 %v40
    %v64 = vunpack.c.h.b16 %v40
    %v65 = vpack.c.b16 %v59, %v57
    %v66 = vpack.c.b16 %v60, %v58
    %v67 = vpack.c.b16 %v63, %v61
    %v68 = vpack.c.b16 %v64, %v62
    %vm73 = vcmask 261120
    %v75 = vsel %vm73, %v36, 0
    %77 = vmatprep.subr.bf16.mxu0 0
    %78 = vmatpush1.bf16.msra.mxu0 0
    %79 = vmatprep.subr.bf16.mxu0 0
    %80 = vmatpush1.bf16.msra.mxu0 0
    %81 = vmatprep.subr.bf16.mxu0 0
    %82 = vmatpush1.bf16.msra.mxu0 0
    %83 = vmatprep.subr.bf16.mxu0 0
    %84 = vmatpush1.bf16.msra.mxu0 0
    %85 = vmatprep.subr.bf16.mxu0 0
    %86 = vmatpush1.bf16.msra.mxu0 0
    %87 = vmatprep.subr.bf16.mxu0 0
    %88 = vmatpush1.bf16.msra.mxu0 0
    %89 = vmatprep.subr.bf16.mxu0 %v68
    %90 = vmatpush1.bf16.msra.mxu0 %v67
    %91 = vmatprep.subr.bf16.mxu0 %v66
    %92 = vmatpush1.bf16.msra.mxu0 %v65
    %93 = vmatprep.subr.bf16.mxu0 0
    %94 = vmatpush2.bf16.msra.mxu0 0
    %95 = vmatprep.subr.bf16.mxu0 0
    %96 = vmatpush2.bf16.msra.mxu0 0
    %97 = vmatprep.subr.bf16.mxu0 0
    %98 = vmatpush2.bf16.msra.mxu0 0
    %99 = vmatprep.subr.bf16.mxu0 0
    %100 = vmatpush2.bf16.msra.mxu0 0
    %101 = vmatprep.subr.bf16.mxu0 0
    %102 = vmatpush2.bf16.msra.mxu0 0
    %103 = vmatprep.subr.bf16.mxu0 0
    %104 = vmatpush2.bf16.msra.mxu0 0
    %105 = vmatprep.subr.bf16.mxu0 0
    %106 = vmatpush2.bf16.msra.mxu0 0
    %107 = vmatprep.subr.bf16.mxu0 0
    %108 = vmatpush2.bf16.msra.mxu0 0
    %109 = vmatprep.mubr.bf16.mxu0 0
    %110 = vmatmul.mubr.bf16.gmra.mxu0 %v75
    %v111 = vpop.f32.mrf.mxu0
    %v112 = vadd.f32 %v46, %v111
    %v113 = vpop.f32.mrf.mxu0
    %v114 = vadd.f32 %v50, %v113
    %v115 = vpop.f32.mrf.mxu0
    %v116 = vpop.f32.mrf.mxu0
    %117 = vdwg.mxu0
    %v118 = vxor.u32 %v114, 2147483648
    %v119 = vmul.f32 %v118, 1.442695
    %v120 = vpow.pop %v119
    %v121 = vadd.f32 %v120, 1.0
    %v122 = vrcp.pop %v121
    %v123 = vmul.f32 1.0, %v122
    %124 = vmax.xlane.f32.xlu0 %v112
    %v125 = vpop.xlane.xlu0 %124
    %v126 = vsub.f32 %v112, %v125
    %v127 = vmul.f32 %v126, 1.442695
    %v128 = vpow.pop %v127
    %129 = vadd.xlane.f32.xlu0 %v128
    %v130 = vpop.xlane.xlu0 %129
    %v131 = vsub.f32 1.0, %v123
    %v132 = vrcp.pop %v130
    %v133 = vmul.f32 %v131, %v132
    %135 = vset.pattern.permute.xlu0 0
    %136 = vperm.xlu0 %135, %v133
    %v137 = vpop.permute.xlu0 %136
    %v139 = vmul.f32 %v128, %v137
    %140 = vst.msk [vmem:[#allocation5] sm:$0xff] %vm73, %v139
    %v141 = vld [vmem:[%s3] sm:$0xf]
    %v144 = vunpack.c.l.s4 1966171168
    %v145 = vunpack.c.0.s8 %v144
    %v146 = vlaneseq
    %v147 = vshrl.u32 %v146, 7
    %v148 = vsub.s32 %v145, %v147
    %v149 = vrot.slane %v141, %v148
    %v150 = vcombine.high %v149, %v149
    %v152 = vunpack.c.l.s4 1966171168
    %v153 = vunpack.c.0.s8 %v152
    %v154 = vlaneseq
    %v155 = vshrl.u32 %v154, 7
    %v156 = vsub.s32 %v153, %v155
    %v157 = vrot.slane %v149, %v156
    %v159 = vunpack.c.l.s4 1966171168
    %v160 = vunpack.c.0.s8 %v159
    %v161 = vlaneseq
    %v162 = vshrl.u32 %v161, 7
    %v163 = vsub.s32 %v160, %v162
    %v164 = vrot.slane %v150, %v163
    %v165 = vcombine.high %v157, %v157
    %v166 = vcombine.high %v164, %v164
    %v171 = vld [vmem:[%s4] sm:$0xf]
    %v172 = vld [vmem:[%s4 + $0x4] sm:$0xf]
    %173 = vxpose.xlu0.c.b16.start [1/8] %v157, 128
    %174 = vxpose.xlu0.c.b16.cont [2/8] 0, 128
    %175 = vxpose.xlu0.c.b16.cont [3/8] 0, 128
    %176 = vxpose.xlu0.c.b16.cont [4/8] 0, 128
    %177 = vxpose.xlu0.c.b16.cont [5/8] 0, 128
    %178 = vxpose.xlu0.c.b16.cont [6/8] 0, 128
    %179 = vxpose.xlu0.c.b16.cont [7/8] 0, 128
    %180 = vxpose.xlu0.c.b16.end [8/8] 0, 128
    %v181 = vpop.trf.xlu0
    %v182 = vpop.trf.xlu0
    %v183 = vpop.trf.xlu0
    %v184 = vpop.trf.xlu0
    %v185 = vpop.trf.xlu0
    %v186 = vpop.trf.xlu0
    %v187 = vpop.trf.xlu0
    %v188 = vpop.trf.xlu0
    %189 = vxpose.xlu0.c.b16.start [1/8] %v164, 128
    %190 = vxpose.xlu0.c.b16.cont [2/8] 0, 128
    %191 = vxpose.xlu0.c.b16.cont [3/8] 0, 128
    %192 = vxpose.xlu0.c.b16.cont [4/8] 0, 128
    %193 = vxpose.xlu0.c.b16.cont [5/8] 0, 128
    %194 = vxpose.xlu0.c.b16.cont [6/8] 0, 128
    %195 = vxpose.xlu0.c.b16.cont [7/8] 0, 128
    %196 = vxpose.xlu0.c.b16.end [8/8] 0, 128
    %v197 = vpop.trf.xlu0
    %v198 = vpop.trf.xlu0
    %v199 = vpop.trf.xlu0
    %v200 = vpop.trf.xlu0
    %v201 = vpop.trf.xlu0
    %v202 = vpop.trf.xlu0
    %v203 = vpop.trf.xlu0
    %v204 = vpop.trf.xlu0
    %205 = vxpose.xlu0.c.b16.start [1/8] %v165, 128
    %206 = vxpose.xlu0.c.b16.cont [2/8] 0, 128
    %207 = vxpose.xlu0.c.b16.cont [3/8] 0, 128
    %208 = vxpose.xlu0.c.b16.cont [4/8] 0, 128
    %209 = vxpose.xlu0.c.b16.cont [5/8] 0, 128
    %210 = vxpose.xlu0.c.b16.cont [6/8] 0, 128
    %211 = vxpose.xlu0.c.b16.cont [7/8] 0, 128
    %212 = vxpose.xlu0.c.b16.end [8/8] 0, 128
    %v213 = vpop.trf.xlu0
    %v214 = vpop.trf.xlu0
    %v215 = vpop.trf.xlu0
    %v216 = vpop.trf.xlu0
    %v217 = vpop.trf.xlu0
    %v218 = vpop.trf.xlu0
    %v219 = vpop.trf.xlu0
    %v220 = vpop.trf.xlu0
    %221 = vxpose.xlu0.c.b16.start [1/8] %v166, 128
    %222 = vxpose.xlu0.c.b16.cont [2/8] 0, 128
    %223 = vxpose.xlu0.c.b16.cont [3/8] 0, 128
    %224 = vxpose.xlu0.c.b16.cont [4/8] 0, 128
    %225 = vxpose.xlu0.c.b16.cont [5/8] 0, 128
    %226 = vxpose.xlu0.c.b16.cont [6/8] 0, 128
    %227 = vxpose.xlu0.c.b16.cont [7/8] 0, 128
    %228 = vxpose.xlu0.c.b16.end [8/8] 0, 128
    %v229 = vpop.trf.xlu0
    %v230 = vpop.trf.xlu0
    %v231 = vpop.trf.xlu0
    %v232 = vpop.trf.xlu0
    %v233 = vpop.trf.xlu0
    %v234 = vpop.trf.xlu0
    %v235 = vpop.trf.xlu0
    %v236 = vpop.trf.xlu0
    %v238 = vunpack.c.l.s4 1983009808
    %v239 = vunpack.c.0.s8 %v238
    %v240 = vlaneseq
    %v241 = vshrl.u32 %v240, 7
    %v242 = vsub.s32 %v239, %v241
    %v243 = vrot.slane %v181, %v242
    %v245 = vunpack.c.l.s4 1983009808
    %v246 = vunpack.c.0.s8 %v245
    %v247 = vlaneseq
    %v248 = vshrl.u32 %v247, 7
    %v249 = vsub.s32 %v246, %v248
    %v250 = vrot.slane %v213, %v249
    %v251 = vcombine.low %v243, %v250
    %v252 = vcombine.high %v243, %v250
    %v254 = vunpack.c.l.s4 1934713408
    %v255 = vunpack.c.0.s8 %v254
    %v256 = vlaneseq
    %v257 = vshrl.u32 %v256, 7
    %v258 = vsub.s32 %v255, %v257
    %v259 = vrot.slane %v251, %v258
    %v261 = vunpack.c.l.s4 1934713408
    %v262 = vunpack.c.0.s8 %v261
    %v263 = vlaneseq
    %v264 = vshrl.u32 %v263, 7
    %v265 = vsub.s32 %v262, %v264
    %v266 = vrot.slane %v252, %v265
    %v267 = vcombine.high %v259, 0
    %v268 = vcombine.high %v266, 0
    %v270 = vunpack.c.l.s4 1983009808
    %v271 = vunpack.c.0.s8 %v270
    %v272 = vlaneseq
    %v273 = vshrl.u32 %v272, 7
    %v274 = vsub.s32 %v271, %v273
    %v275 = vrot.slane %v197, %v274
    %v277 = vunpack.c.l.s4 1983009808
    %v278 = vunpack.c.0.s8 %v277
    %v279 = vlaneseq
    %v280 = vshrl.u32 %v279, 7
    %v281 = vsub.s32 %v278, %v280
    %v282 = vrot.slane %v229, %v281
    %v283 = vcombine.low %v275, %v282
    %v284 = vcombine.high %v275, %v282
    %v286 = vunpack.c.l.s4 1934713408
    %v287 = vunpack.c.0.s8 %v286
    %v288 = vlaneseq
    %v289 = vshrl.u32 %v288, 7
    %v290 = vsub.s32 %v287, %v289
    %v291 = vrot.slane %v283, %v290
    %v293 = vunpack.c.l.s4 1934713408
    %v294 = vunpack.c.0.s8 %v293
    %v295 = vlaneseq
    %v296 = vshrl.u32 %v295, 7
    %v297 = vsub.s32 %v294, %v296
    %v298 = vrot.slane %v284, %v297
    %v299 = vcombine.high %v291, 0
    %v300 = vcombine.high %v298, 0
    %v303 = vpack.i.b16 %v291, %v259
    %v305 = vshrl.u32 %v259, 16
    %v306 = vshrl.u32 %v291, 16
    %v307 = vpack.i.b16 %v306, %v305
    %v311 = vpack.i.b16 %v299, %v267
    %v313 = vshrl.u32 %v267, 16
    %v314 = vshrl.u32 %v299, 16
    %v315 = vpack.i.b16 %v314, %v313
    %v319 = vpack.i.b16 %v298, %v266
    %v321 = vshrl.u32 %v266, 16
    %v322 = vshrl.u32 %v298, 16
    %v323 = vpack.i.b16 %v322, %v321
    %v327 = vpack.i.b16 %v300, %v268
    %v329 = vshrl.u32 %v268, 16
    %v330 = vshrl.u32 %v300, 16
    %v331 = vpack.i.b16 %v330, %v329
    %333 = vxpose.xlu0.c.b16.start [1/8] %v303, 128
    %334 = vxpose.xlu0.c.b16.cont [2/8] 0, 128
    %335 = vxpose.xlu0.c.b16.cont [3/8] 0, 128
    %336 = vxpose.xlu0.c.b16.cont [4/8] 0, 128
    %337 = vxpose.xlu0.c.b16.cont [5/8] 0, 128
    %338 = vxpose.xlu0.c.b16.cont [6/8] 0, 128
    %339 = vxpose.xlu0.c.b16.cont [7/8] 0, 128
    %340 = vxpose.xlu0.c.b16.end [8/8] 0, 128
    %v341 = vpop.trf.xlu0
    %v342 = vpop.trf.xlu0
    %v343 = vpop.trf.xlu0
    %v344 = vpop.trf.xlu0
    %v345 = vpop.trf.xlu0
    %v346 = vpop.trf.xlu0
    %v347 = vpop.trf.xlu0
    %v348 = vpop.trf.xlu0
    %349 = vxpose.xlu0.c.b16.start [1/8] %v307, 128
    %350 = vxpose.xlu0.c.b16.cont [2/8] 0, 128
    %351 = vxpose.xlu0.c.b16.cont [3/8] 0, 128
    %352 = vxpose.xlu0.c.b16.cont [4/8] 0, 128
    %353 = vxpose.xlu0.c.b16.cont [5/8] 0, 128
    %354 = vxpose.xlu0.c.b16.cont [6/8] 0, 128
    %355 = vxpose.xlu0.c.b16.cont [7/8] 0, 128
    %356 = vxpose.xlu0.c.b16.end [8/8] 0, 128
    %v357 = vpop.trf.xlu0
    %v358 = vpop.trf.xlu0
    %v359 = vpop.trf.xlu0
    %v360 = vpop.trf.xlu0
    %v361 = vpop.trf.xlu0
    %v362 = vpop.trf.xlu0
    %v363 = vpop.trf.xlu0
    %v364 = vpop.trf.xlu0
    %365 = vxpose.xlu0.c.b16.start [1/8] %v311, 128
    %366 = vxpose.xlu0.c.b16.cont [2/8] 0, 128
    %367 = vxpose.xlu0.c.b16.cont [3/8] 0, 128
    %368 = vxpose.xlu0.c.b16.cont [4/8] 0, 128
    %369 = vxpose.xlu0.c.b16.cont [5/8] 0, 128
    %370 = vxpose.xlu0.c.b16.cont [6/8] 0, 128
    %371 = vxpose.xlu0.c.b16.cont [7/8] 0, 128
    %372 = vxpose.xlu0.c.b16.end [8/8] 0, 128
    %v373 = vpop.trf.xlu0
    %v374 = vpop.trf.xlu0
    %v375 = vpop.trf.xlu0
    %v376 = vpop.trf.xlu0
    %v377 = vpop.trf.xlu0
    %v378 = vpop.trf.xlu0
    %v379 = vpop.trf.xlu0
    %v380 = vpop.trf.xlu0
    %381 = vxpose.xlu0.c.b16.start [1/8] %v315, 128
    %382 = vxpose.xlu0.c.b16.cont [2/8] 0, 128
    %383 = vxpose.xlu0.c.b16.cont [3/8] 0, 128
    %384 = vxpose.xlu0.c.b16.cont [4/8] 0, 128
    %385 = vxpose.xlu0.c.b16.cont [5/8] 0, 128
    %386 = vxpose.xlu0.c.b16.cont [6/8] 0, 128
    %387 = vxpose.xlu0.c.b16.cont [7/8] 0, 128
    %388 = vxpose.xlu0.c.b16.end [8/8] 0, 128
    %v389 = vpop.trf.xlu0
    %v390 = vpop.trf.xlu0
    %v391 = vpop.trf.xlu0
    %v392 = vpop.trf.xlu0
    %v393 = vpop.trf.xlu0
    %v394 = vpop.trf.xlu0
    %v395 = vpop.trf.xlu0
    %v396 = vpop.trf.xlu0
    %397 = vxpose.xlu0.c.b16.start [1/8] %v319, 128
    %398 = vxpose.xlu0.c.b16.cont [2/8] 0, 128
    %399 = vxpose.xlu0.c.b16.cont [3/8] 0, 128
    %400 = vxpose.xlu0.c.b16.cont [4/8] 0, 128
    %401 = vxpose.xlu0.c.b16.cont [5/8] 0, 128
    %402 = vxpose.xlu0.c.b16.cont [6/8] 0, 128
    %403 = vxpose.xlu0.c.b16.cont [7/8] 0, 128
    %404 = vxpose.xlu0.c.b16.end [8/8] 0, 128
    %v405 = vpop.trf.xlu0
    %v406 = vpop.trf.xlu0
    %v407 = vpop.trf.xlu0
    %v408 = vpop.trf.xlu0
    %v409 = vpop.trf.xlu0
    %v410 = vpop.trf.xlu0
    %v411 = vpop.trf.xlu0
    %v412 = vpop.trf.xlu0
    %413 = vxpose.xlu0.c.b16.start [1/8] %v323, 128
    %414 = vxpose.xlu0.c.b16.cont [2/8] 0, 128
    %415 = vxpose.xlu0.c.b16.cont [3/8] 0, 128
    %416 = vxpose.xlu0.c.b16.cont [4/8] 0, 128
    %417 = vxpose.xlu0.c.b16.cont [5/8] 0, 128
    %418 = vxpose.xlu0.c.b16.cont [6/8] 0, 128
    %419 = vxpose.xlu0.c.b16.cont [7/8] 0, 128
    %420 = vxpose.xlu0.c.b16.end [8/8] 0, 128
    %v421 = vpop.trf.xlu0
    %v422 = vpop.trf.xlu0
    %v423 = vpop.trf.xlu0
    %v424 = vpop.trf.xlu0
    %v425 = vpop.trf.xlu0
    %v426 = vpop.trf.xlu0
    %v427 = vpop.trf.xlu0
    %v428 = vpop.trf.xlu0
    %429 = vxpose.xlu0.c.b16.start [1/8] %v327, 128
    %430 = vxpose.xlu0.c.b16.cont [2/8] 0, 128
    %431 = vxpose.xlu0.c.b16.cont [3/8] 0, 128
    %432 = vxpose.xlu0.c.b16.cont [4/8] 0, 128
    %433 = vxpose.xlu0.c.b16.cont [5/8] 0, 128
    %434 = vxpose.xlu0.c.b16.cont [6/8] 0, 128
    %435 = vxpose.xlu0.c.b16.cont [7/8] 0, 128
    %436 = vxpose.xlu0.c.b16.end [8/8] 0, 128
    %v437 = vpop.trf.xlu0
    %v438 = vpop.trf.xlu0
    %v439 = vpop.trf.xlu0
    %v440 = vpop.trf.xlu0
    %v441 = vpop.trf.xlu0
    %v442 = vpop.trf.xlu0
    %v443 = vpop.trf.xlu0
    %v444 = vpop.trf.xlu0
    %445 = vxpose.xlu0.c.b16.start [1/8] %v331, 128
    %446 = vxpose.xlu0.c.b16.cont [2/8] 0, 128
    %447 = vxpose.xlu0.c.b16.cont [3/8] 0, 128
    %448 = vxpose.xlu0.c.b16.cont [4/8] 0, 128
    %449 = vxpose.xlu0.c.b16.cont [5/8] 0, 128
    %450 = vxpose.xlu0.c.b16.cont [6/8] 0, 128
    %451 = vxpose.xlu0.c.b16.cont [7/8] 0, 128
    %452 = vxpose.xlu0.c.b16.end [8/8] 0, 128
    %v453 = vpop.trf.xlu0
    %v454 = vpop.trf.xlu0
    %v455 = vpop.trf.xlu0
    %v456 = vpop.trf.xlu0
    %v457 = vpop.trf.xlu0
    %v458 = vpop.trf.xlu0
    %v459 = vpop.trf.xlu0
    %v460 = vpop.trf.xlu0
    %v461 = vcombine.low %v341, %v405
    %v463 = vunpack.c.l.s4 1983009808
    %v464 = vunpack.c.0.s8 %v463
    %v465 = vlaneseq
    %v466 = vshrl.u32 %v465, 7
    %v467 = vsub.s32 %v464, %v466
    %v468 = vrot.slane %v461, %v467
    %v469 = vcombine.low %v373, %v437
    %v471 = vunpack.c.l.s4 1983009808
    %v472 = vunpack.c.0.s8 %v471
    %v473 = vlaneseq
    %v474 = vshrl.u32 %v473, 7
    %v475 = vsub.s32 %v472, %v474
    %v476 = vrot.slane %v469, %v475
    %v477 = vcombine.low %v468, %v476
    %v479 = vunpack.c.l.s4 1934713408
    %v480 = vunpack.c.0.s8 %v479
    %v481 = vlaneseq
    %v482 = vshrl.u32 %v481, 7
    %v483 = vsub.s32 %v480, %v482
    %v484 = vrot.slane %v477, %v483
    %v485 = vcombine.low %v357, %v421
    %v487 = vunpack.c.l.s4 1983009808
    %v488 = vunpack.c.0.s8 %v487
    %v489 = vlaneseq
    %v490 = vshrl.u32 %v489, 7
    %v491 = vsub.s32 %v488, %v490
    %v492 = vrot.slane %v485, %v491
    %v493 = vcombine.low %v389, %v453
    %v495 = vunpack.c.l.s4 1983009808
    %v496 = vunpack.c.0.s8 %v495
    %v497 = vlaneseq
    %v498 = vshrl.u32 %v497, 7
    %v499 = vsub.s32 %v496, %v498
    %v500 = vrot.slane %v493, %v499
    %v501 = vcombine.low %v492, %v500
    %v503 = vunpack.c.l.s4 1934713408
    %v504 = vunpack.c.0.s8 %v503
    %v505 = vlaneseq
    %v506 = vshrl.u32 %v505, 7
    %v507 = vsub.s32 %v504, %v506
    %v508 = vrot.slane %v501, %v507
    %v511 = vpack.i.b16 %v508, %v484
    %v512 = vshrl.u32 %v484, 16
    %v513 = vshrl.u32 %v508, 16
    %v514 = vpack.i.b16 %v513, %v512
    %515 = vxpose.xlu0.c.b16.start [1/8] %v171, 128
    %516 = vxpose.xlu0.c.b16.cont [2/8] 0, 128
    %517 = vxpose.xlu0.c.b16.cont [3/8] 0, 128
    %518 = vxpose.xlu0.c.b16.cont [4/8] 0, 128
    %519 = vxpose.xlu0.c.b16.cont [5/8] 0, 128
    %520 = vxpose.xlu0.c.b16.cont [6/8] 0, 128
    %521 = vxpose.xlu0.c.b16.cont [7/8] 0, 128
    %522 = vxpose.xlu0.c.b16.end [8/8] 0, 128
    %v523 = vpop.trf.xlu0
    %v524 = vpop.trf.xlu0
    %v525 = vpop.trf.xlu0
    %v526 = vpop.trf.xlu0
    %v527 = vpop.trf.xlu0
    %v528 = vpop.trf.xlu0
    %v529 = vpop.trf.xlu0
    %v530 = vpop.trf.xlu0
    %vm531 = vcmask 64512
    %v533 = vsel %vm531, %v523, 0
    %vm535 = vcmask 1043456
    %v537 = vsel %vm535, %v511, 0
    %539 = vmatprep.subr.bf16.mxu0 0
    %540 = vmatpush1.bf16.msra.mxu0 0
    %541 = vmatprep.subr.bf16.mxu0 0
    %542 = vmatpush1.bf16.msra.mxu0 0
    %543 = vmatprep.subr.bf16.mxu0 0
    %544 = vmatpush1.bf16.msra.mxu0 0
    %545 = vmatprep.subr.bf16.mxu0 0
    %546 = vmatpush1.bf16.msra.mxu0 0
    %547 = vmatprep.subr.bf16.mxu0 0
    %548 = vmatpush1.bf16.msra.mxu0 0
    %549 = vmatprep.subr.bf16.mxu0 0
    %550 = vmatpush1.bf16.msra.mxu0 0
    %551 = vmatprep.subr.bf16.mxu0 0
    %552 = vmatpush1.bf16.msra.mxu0 0
    %553 = vmatprep.subr.bf16.mxu0 0
    %554 = vmatpush1.bf16.msra.mxu0 %v537
    %555 = vmatprep.subr.bf16.mxu0 0
    %556 = vmatpush2.bf16.msra.mxu0 0
    %557 = vmatprep.subr.bf16.mxu0 0
    %558 = vmatpush2.bf16.msra.mxu0 0
    %559 = vmatprep.subr.bf16.mxu0 0
    %560 = vmatpush2.bf16.msra.mxu0 0
    %561 = vmatprep.subr.bf16.mxu0 0
    %562 = vmatpush2.bf16.msra.mxu0 0
    %563 = vmatprep.subr.bf16.mxu0 0
    %564 = vmatpush2.bf16.msra.mxu0 0
    %565 = vmatprep.subr.bf16.mxu0 0
    %566 = vmatpush2.bf16.msra.mxu0 0
    %567 = vmatprep.subr.bf16.mxu0 0
    %568 = vmatpush2.bf16.msra.mxu0 0
    %569 = vmatprep.subr.bf16.mxu0 0
    %570 = vmatpush2.bf16.msra.mxu0 0
    %571 = vmatprep.mubr.bf16.mxu0 0
    %572 = vmatmul.mubr.bf16.gmra.mxu0 %v533
    %v573 = vpop.f32.mrf.mxu0
    %v574 = vadd.f32 0.0, %v573
    %v575 = vpop.f32.mrf.mxu0
    %v576 = vpop.f32.mrf.mxu0
    %v577 = vpop.f32.mrf.mxu0
    %578 = vdwg.mxu0
    %579 = vxpose.xlu0.c.b16.start [1/8] %v172, 128
    %580 = vxpose.xlu0.c.b16.cont [2/8] 0, 128
    %581 = vxpose.xlu0.c.b16.cont [3/8] 0, 128
    %582 = vxpose.xlu0.c.b16.cont [4/8] 0, 128
    %583 = vxpose.xlu0.c.b16.cont [5/8] 0, 128
    %584 = vxpose.xlu0.c.b16.cont [6/8] 0, 128
    %585 = vxpose.xlu0.c.b16.cont [7/8] 0, 128
    %586 = vxpose.xlu0.c.b16.end [8/8] 0, 128
    %v587 = vpop.trf.xlu0
    %v588 = vpop.trf.xlu0
    %v589 = vpop.trf.xlu0
    %v590 = vpop.trf.xlu0
    %v591 = vpop.trf.xlu0
    %v592 = vpop.trf.xlu0
    %v593 = vpop.trf.xlu0
    %v594 = vpop.trf.xlu0
    %v596 = vsel %vm531, %v587, 0
    %v599 = vsel %vm535, %v514, 0
    %601 = vmatprep.subr.bf16.mxu0 0
    %602 = vmatpush1.bf16.msra.mxu0 0
    %603 = vmatprep.subr.bf16.mxu0 0
    %604 = vmatpush1.bf16.msra.mxu0 0
    %605 = vmatprep.subr.bf16.mxu0 0
    %606 = vmatpush1.bf16.msra.mxu0 0
    %607 = vmatprep.subr.bf16.mxu0 0
    %608 = vmatpush1.bf16.msra.mxu0 0
    %609 = vmatprep.subr.bf16.mxu0 0
    %610 = vmatpush1.bf16.msra.mxu0 0
    %611 = vmatprep.subr.bf16.mxu0 0
    %612 = vmatpush1.bf16.msra.mxu0 0
    %613 = vmatprep.subr.bf16.mxu0 0
    %614 = vmatpush1.bf16.msra.mxu0 0
    %615 = vmatprep.subr.bf16.mxu0 0
    %616 = vmatpush1.bf16.msra.mxu0 %v599
    %617 = vmatprep.subr.bf16.mxu0 0
    %618 = vmatpush2.bf16.msra.mxu0 0
    %619 = vmatprep.subr.bf16.mxu0 0
    %620 = vmatpush2.bf16.msra.mxu0 0
    %621 = vmatprep.subr.bf16.mxu0 0
    %622 = vmatpush2.bf16.msra.mxu0 0
    %623 = vmatprep.subr.bf16.mxu0 0
    %624 = vmatpush2.bf16.msra.mxu0 0
    %625 = vmatprep.subr.bf16.mxu0 0
    %626 = vmatpush2.bf16.msra.mxu0 0
    %627 = vmatprep.subr.bf16.mxu0 0
    %628 = vmatpush2.bf16.msra.mxu0 0
    %629 = vmatprep.subr.bf16.mxu0 0
    %630 = vmatpush2.bf16.msra.mxu0 0
    %631 = vmatprep.subr.bf16.mxu0 0
    %632 = vmatpush2.bf16.msra.mxu0 0
    %633 = vmatprep.mubr.bf16.mxu0 0
    %634 = vmatmul.mubr.bf16.gmra.mxu0 %v596
    %v635 = vpop.f32.mrf.mxu0
    %v636 = vadd.f32 0.0, %v635
    %v637 = vpop.f32.mrf.mxu0
    %v638 = vpop.f32.mrf.mxu0
    %v639 = vpop.f32.mrf.mxu0
    %640 = vdwg.mxu0
    %641 = vxpose.xlu0.b32.start [1/16] %v574, 128
    %642 = vxpose.xlu0.b32.cont [2/16] 0.0, 128
    %643 = vxpose.xlu0.b32.cont [3/16] 0.0, 128
    %644 = vxpose.xlu0.b32.cont [4/16] 0.0, 128
    %645 = vxpose.xlu0.b32.cont [5/16] 0.0, 128
    %646 = vxpose.xlu0.b32.cont [6/16] 0.0, 128
    %647 = vxpose.xlu0.b32.cont [7/16] 0.0, 128
    %648 = vxpose.xlu0.b32.cont [8/16] 0.0, 128
    %649 = vxpose.xlu0.b32.cont [9/16] 0.0, 128
    %650 = vxpose.xlu0.b32.cont [10/16] 0.0, 128
    %651 = vxpose.xlu0.b32.cont [11/16] 0.0, 128
    %652 = vxpose.xlu0.b32.cont [12/16] 0.0, 128
    %653 = vxpose.xlu0.b32.cont [13/16] 0.0, 128
    %654 = vxpose.xlu0.b32.cont [14/16] 0.0, 128
    %655 = vxpose.xlu0.b32.cont [15/16] 0.0, 128
    %656 = vxpose.xlu0.b32.end [16/16] 0.0, 128
    %v657 = vpop.trf.xlu0
    %v658 = vpop.trf.xlu0
    %v659 = vpop.trf.xlu0
    %v660 = vpop.trf.xlu0
    %v661 = vpop.trf.xlu0
    %v662 = vpop.trf.xlu0
    %v663 = vpop.trf.xlu0
    %v664 = vpop.trf.xlu0
    %v665 = vpop.trf.xlu0
    %v666 = vpop.trf.xlu0
    %v667 = vpop.trf.xlu0
    %v668 = vpop.trf.xlu0
    %v669 = vpop.trf.xlu0
    %v670 = vpop.trf.xlu0
    %v671 = vpop.trf.xlu0
    %v672 = vpop.trf.xlu0
    %673 = vxpose.xlu0.b32.start [1/16] %v636, 128
    %674 = vxpose.xlu0.b32.cont [2/16] 0.0, 128
    %675 = vxpose.xlu0.b32.cont [3/16] 0.0, 128
    %676 = vxpose.xlu0.b32.cont [4/16] 0.0, 128
    %677 = vxpose.xlu0.b32.cont [5/16] 0.0, 128
    %678 = vxpose.xlu0.b32.cont [6/16] 0.0, 128
    %679 = vxpose.xlu0.b32.cont [7/16] 0.0, 128
    %680 = vxpose.xlu0.b32.cont [8/16] 0.0, 128
    %681 = vxpose.xlu0.b32.cont [9/16] 0.0, 128
    %682 = vxpose.xlu0.b32.cont [10/16] 0.0, 128
    %683 = vxpose.xlu0.b32.cont [11/16] 0.0, 128
    %684 = vxpose.xlu0.b32.cont [12/16] 0.0, 128
    %685 = vxpose.xlu0.b32.cont [13/16] 0.0, 128
    %686 = vxpose.xlu0.b32.cont [14/16] 0.0, 128
    %687 = vxpose.xlu0.b32.cont [15/16] 0.0, 128
    %688 = vxpose.xlu0.b32.end [16/16] 0.0, 128
    %v689 = vpop.trf.xlu0
    %v690 = vpop.trf.xlu0
    %v691 = vpop.trf.xlu0
    %v692 = vpop.trf.xlu0
    %v693 = vpop.trf.xlu0
    %v694 = vpop.trf.xlu0
    %v695 = vpop.trf.xlu0
    %v696 = vpop.trf.xlu0
    %v697 = vpop.trf.xlu0
    %v698 = vpop.trf.xlu0
    %v699 = vpop.trf.xlu0
    %v700 = vpop.trf.xlu0
    %v701 = vpop.trf.xlu0
    %v702 = vpop.trf.xlu0
    %v703 = vpop.trf.xlu0
    %v704 = vpop.trf.xlu0
    %v706 = vunpack.c.l.s4 1983009808
    %v707 = vunpack.c.0.s8 %v706
    %v708 = vlaneseq
    %v709 = vshrl.u32 %v708, 7
    %v710 = vsub.s32 %v707, %v709
    %v711 = vrot.slane %v657, %v710
    %v713 = vunpack.c.l.s4 1983009808
    %v714 = vunpack.c.0.s8 %v713
    %v715 = vlaneseq
    %v716 = vshrl.u32 %v715, 7
    %v717 = vsub.s32 %v714, %v716
    %v718 = vrot.slane %v689, %v717
    %v719 = vcombine.low %v711, %v718
    %v720 = vcombine.high %v711, %v718
    %v722 = vunpack.c.l.s4 1934713408
    %v723 = vunpack.c.0.s8 %v722
    %v724 = vlaneseq
    %v725 = vshrl.u32 %v724, 7
    %v726 = vsub.s32 %v723, %v725
    %v727 = vrot.slane %v719, %v726
    %v729 = vunpack.c.l.s4 1934713408
    %v730 = vunpack.c.0.s8 %v729
    %v731 = vlaneseq
    %v732 = vshrl.u32 %v731, 7
    %v733 = vsub.s32 %v730, %v732
    %v734 = vrot.slane %v720, %v733
    %v735 = vcombine.high %v727, 0.0
    %v736 = vcombine.high %v734, 0.0
    %738 = vset.pattern.permute.xlu0 0
    %739 = vperm.xlu0 %738, %v123
    %v740 = vpop.permute.xlu0 %739
    %v742 = vunpack.c.l.s4 269488144
    %v743 = vunpack.c.0.s8 %v742
    %v744 = vlaneseq
    %v745 = vshrl.u32 %v744, 7
    %v746 = vsub.s32 %v743, %v745
    %v747 = vrot.slane %v740, %v746
    %v749 = vunpack.c.l.s4 842150450
    %v750 = vunpack.c.0.s8 %v749
    %v751 = vlaneseq
    %v752 = vshrl.u32 %v751, 7
    %v753 = vsub.s32 %v750, %v752
    %v754 = vrot.slane %v740, %v753
    %v756 = vunpack.c.l.s4 1414812756
    %v757 = vunpack.c.0.s8 %v756
    %v758 = vlaneseq
    %v759 = vshrl.u32 %v758, 7
    %v760 = vsub.s32 %v757, %v759
    %v761 = vrot.slane %v740, %v760
    %v763 = vunpack.c.l.s4 1987475062
    %v764 = vunpack.c.0.s8 %v763
    %v765 = vlaneseq
    %v766 = vshrl.u32 %v765, 7
    %v767 = vsub.s32 %v764, %v766
    %v768 = vrot.slane %v740, %v767
    %v773 = vmul.f32 %v727, %v747
    %v774 = vmul.f32 %v735, %v754
    %v775 = vmul.f32 %v734, %v761
    %v776 = vmul.f32 %v736, %v768
    %v781 = vcombine.low %v773, %v774
    %v782 = vcombine.low %v775, %v776
    %v784 = vunpack.c.l.s4 1983009808
    %v785 = vunpack.c.0.s8 %v784
    %v786 = vlaneseq
    %v787 = vshrl.u32 %v786, 7
    %v788 = vsub.s32 %v785, %v787
    %v789 = vrot.slane %v781, %v788
    %v791 = vunpack.c.l.s4 1983009808
    %v792 = vunpack.c.0.s8 %v791
    %v793 = vlaneseq
    %v794 = vshrl.u32 %v793, 7
    %v795 = vsub.s32 %v792, %v794
    %v796 = vrot.slane %v782, %v795
    %v797 = vcombine.low %v789, %v796
    %798 = vrot.lane.b32.xlu0 %v797, 32
    %v799 = vpop.permute.xlu0 %798
    %vm801 = vcmask 326912
    %802 = vst.msk [vmem:[#allocation5] sm:$0xff] %vm801, %v799
    // Predicated region
    $region26: #{forward.1} parent=1 // pred_check
      _
    $region27: #{forward.1} parent=1 // pred_check_branch
      %804 = sbr.rel (0) target = $region29
    $region28: #{forward.1} parent=1 // pred_region
      %s806 = ssub.s32 128, 128
      %807 = vsyncadd [#allocation4], %s806
      %s809 = sshll.u32 [#allocation5], 4
      %s810 = int_to_ptr.vmem [resolvable:$true] %s809
      %812 = dma.vmem_to_hbm [thread:$0]  %s810, 128, %s5, [#allocation4]
    $region29: #{forward.1} parent=1 // pred_fallthru
      _
    // Predicated region
    $region30: #{forward.1} parent=1 // pred_check
      _
    $region31: #{forward.1} parent=1 // pred_check_branch
      %814 = sbr.rel (0) target = $region33
    $region32: #{forward.1} parent=1 // pred_region
      %815 = dma.done [#allocation4], 128
    $region33: #{forward.1} parent=1 // pred_fallthru
      _
    %816 = vsyncpa [#allocation3], 1
    %817 = vsyncpa [#allocation4], 1

</llo_original>
